<compile_context>
chip_gen: v7x
topology: tpu7x:2x2x1
jax: 0.10.0
libtpu: 0.0.40
codegen_flags: <defaults>
</compile_context>

<pallas_src>
import jax
import jax.numpy as jnp
from jax.experimental import pallas as pl
from jax.experimental.pallas import tpu as pltpu


def _round_up(x, m):
    return ((x + m - 1) // m) * m


def encoder_kernel(x_ref, w1_ref, b1_ref, w2_ref, b2_ref, wh_ref, bh_ref, out_ref):
    """Fused encoder MLP forward for one batch tile.

        h1  = relu(x  @ W1 + b1)
        h2  = relu(h1 @ W2 + b2)
        out = h2 @ [Wm | Wv | 0pad] + [bm | bv | 0pad]   (single lane-dense store)
    """
    cdt = w1_ref.dtype                       # matmul operand dtype (bf16 by default)
    x = x_ref[...].astype(cdt)
    h1 = jnp.dot(x, w1_ref[...], preferred_element_type=jnp.float32) + b1_ref[...]
    h1 = jnp.maximum(h1, 0.0)
    h2 = jnp.dot(h1.astype(cdt), w2_ref[...], preferred_element_type=jnp.float32) + b2_ref[...]
    h2 = jnp.maximum(h2, 0.0)
    out = jnp.dot(h2.astype(cdt), wh_ref[...], preferred_element_type=jnp.float32) + bh_ref[...]
    out_ref[...] = out.astype(out_ref.dtype)


def pack_encoder_params(params, latent_size, compute_dtype=jnp.bfloat16):
    """Fuse the two heads into one lane-padded weight and cast matmul weights."""
    hidden = params["w1"].shape[1]
    head_pad = _round_up(max(2 * latent_size, 128), 128)

    wh = jnp.zeros((hidden, head_pad), jnp.float32)
    wh = wh.at[:, :latent_size].set(params["wm"])
    wh = wh.at[:, latent_size:2 * latent_size].set(params["wv"])
    bh = jnp.zeros((1, head_pad), jnp.float32)
    bh = bh.at[:, :latent_size].set(params["bm"])
    bh = bh.at[:, latent_size:2 * latent_size].set(params["bv"])

    # TODO(synk): on v5e (no bf16 VPU/EUP) prefer compute_dtype=jnp.float32.
    return {
        "w1": params["w1"].astype(compute_dtype),
        "b1": params["b1"].astype(jnp.float32),
        "w2": params["w2"].astype(compute_dtype),
        "b2": params["b2"].astype(jnp.float32),
        "wh": wh.astype(compute_dtype),
        "bh": bh,
    }


def encoder_forward(x, packed, latent_size):
    """x: [B, input_size] f32; packed: output of pack_encoder_params.

    Returns (means [B, latent], log_vars [B, latent]).
    """
    B, d_in = x.shape
    hidden = packed["w1"].shape[1]
    head_pad = packed["wh"].shape[1]

    # Batch tiling: pad B to a sublane multiple; use 128-row tiles once the
    # batch is big enough to amortize per-grid-step overhead (and let v7x
    # shard the parallel batch axis over both TensorCores).
    if B <= 128:
        tile_b = _round_up(B, 8)
        b_pad = tile_b
    else:
        tile_b = 128
        b_pad = _round_up(B, tile_b)
    if b_pad != B:
        x = jnp.pad(x, ((0, b_pad - B), (0, 0)))

    grid = (b_pad // tile_b,)
    const = lambda i: (0, 0)          # weights stay resident across grid steps

    out = pl.pallas_call(
        encoder_kernel,
        out_shape=jax.ShapeDtypeStruct((b_pad, head_pad), jnp.float32),
        grid_spec=pltpu.PrefetchScalarGridSpec(
            num_scalar_prefetch=0,
            grid=grid,
            in_specs=[
                pl.BlockSpec((tile_b, d_in), lambda i: (i, 0)),   # x
                pl.BlockSpec((d_in, hidden), const),              # W1
                pl.BlockSpec((1, hidden), const),                 # b1
                pl.BlockSpec((hidden, hidden), const),            # W2
                pl.BlockSpec((1, hidden), const),                 # b2
                pl.BlockSpec((hidden, head_pad), const),          # fused head W
                pl.BlockSpec((1, head_pad), const),               # fused head b
            ],
            out_specs=pl.BlockSpec((tile_b, head_pad), lambda i: (i, 0)),
        ),
        compiler_params=pltpu.CompilerParams(
            dimension_semantics=("parallel",)),
    )(x, packed["w1"], packed["b1"], packed["w2"], packed["b2"],
      packed["wh"], packed["bh"])

    means = out[:B, :latent_size]
    log_vars = out[:B, latent_size:2 * latent_size]
    return means, log_vars


def xavier_uniform(key, fan_in, fan_out, gain=1.0):
    # Matches torch.nn.init.xavier_uniform_ on a [out, in] weight; we store the
    # transpose [in, out], which has identical fan_in/fan_out.
    bound = gain * jnp.sqrt(6.0 / (fan_in + fan_out))
    return jax.random.uniform(key, (fan_in, fan_out), jnp.float32,
                              minval=-bound, maxval=bound)


def init_encoder_params(key, input_size, hidden_size, latent_size):
    k1, k2, k3, k4 = jax.random.split(key, 4)
    return {
        "w1": xavier_uniform(k1, input_size, hidden_size),
        "b1": jnp.zeros((1, hidden_size), jnp.float32),
        "w2": xavier_uniform(k2, hidden_size, hidden_size),
        "b2": jnp.zeros((1, hidden_size), jnp.float32),
        "wm": xavier_uniform(k3, hidden_size, latent_size),
        "bm": jnp.zeros((1, latent_size), jnp.float32),
        "wv": xavier_uniform(k4, hidden_size, latent_size),
        "bv": jnp.zeros((1, latent_size), jnp.float32),
    }


def encoder_ref(x, p):
    # Pure-JAX f32 reference matching the PyTorch Encoder.forward.
    h1 = jax.nn.relu(x @ p["w1"] + p["b1"])
    h2 = jax.nn.relu(h1 @ p["w2"] + p["b2"])
    return h2 @ p["wm"] + p["bm"], h2 @ p["wv"] + p["bv"]


if __name__ == "__main__":
    # Encoder(layer_sizes=[32, 64], latent_size=16), batch of 8.
    input_size, hidden_size, latent_size = 32, 64, 16
    batch = 8

    key = jax.random.PRNGKey(0)
    kx, kp = jax.random.split(key)
    x = jax.random.normal(kx, (batch, input_size), jnp.float32)
    params = init_encoder_params(kp, input_size, hidden_size, latent_size)

    packed = pack_encoder_params(params, latent_size, compute_dtype=jnp.bfloat16)
    means, log_vars = encoder_forward(x, packed, latent_size)
    jax.block_until_ready((means, log_vars))

    ref_means, ref_log_vars = encoder_ref(x, params)
    assert means.shape == (batch, latent_size)
    assert log_vars.shape == (batch, latent_size)
    # bf16 matmul operands with f32 accumulation -> loosened tolerance vs f32 ref.
    assert jnp.allclose(means, ref_means, atol=5e-2, rtol=5e-2)
    assert jnp.allclose(log_vars, ref_log_vars, atol=5e-2, rtol=5e-2)

    print("KERNEL_OK")
</pallas_src>

<mosaic_0001>
module attributes {stable_mosaic.version = 11 : i64} {
  func.func @encoder_kernel(%arg0: i32, %arg1: memref<8x32xf32, #tpu.memory_space<vmem>>, %arg2: memref<32x64xbf16, #tpu.memory_space<vmem>>, %arg3: memref<1x64xf32, #tpu.memory_space<vmem>>, %arg4: memref<64x64xbf16, #tpu.memory_space<vmem>>, %arg5: memref<1x64xf32, #tpu.memory_space<vmem>>, %arg6: memref<64x128xbf16, #tpu.memory_space<vmem>>, %arg7: memref<1x128xf32, #tpu.memory_space<vmem>>, %arg8: memref<8x128xf32, #tpu.memory_space<vmem>>) attributes {dimension_semantics = [#tpu.dimension_semantics<parallel>], iteration_bounds = array<i64: 1>, scalar_prefetch = 0 : i64, scratch_operands = 0 : i64, tpu.core_type = #tpu.core_type<tc>, window_params = [{transform_indices = @transform_0, window_bounds = array<i64: 8, 32>}, {pipeline_mode = #tpu.pipeline_mode<synchronous>, transform_indices = @transform_1, window_bounds = array<i64: 32, 64>}, {pipeline_mode = #tpu.pipeline_mode<synchronous>, transform_indices = @transform_2, window_bounds = array<i64: 1, 64>}, {pipeline_mode = #tpu.pipeline_mode<synchronous>, transform_indices = @transform_3, window_bounds = array<i64: 64, 64>}, {pipeline_mode = #tpu.pipeline_mode<synchronous>, transform_indices = @transform_4, window_bounds = array<i64: 1, 64>}, {pipeline_mode = #tpu.pipeline_mode<synchronous>, transform_indices = @transform_5, window_bounds = array<i64: 64, 128>}, {pipeline_mode = #tpu.pipeline_mode<synchronous>, transform_indices = @transform_6, window_bounds = array<i64: 1, 128>}, {transform_indices = @transform_7, window_bounds = array<i64: 8, 128>}]} {
    %c0 = arith.constant 0 : index
    %c0_0 = arith.constant 0 : index
    %0 = vector.load %arg1[%c0, %c0_0] : memref<8x32xf32, #tpu.memory_space<vmem>>, vector<8x32xf32>
    %1 = arith.truncf %0 : vector<8x32xf32> to vector<8x32xbf16>
    %c0_1 = arith.constant 0 : index
    %c0_2 = arith.constant 0 : index
    %2 = vector.load %arg2[%c0_1, %c0_2] : memref<32x64xbf16, #tpu.memory_space<vmem>>, vector<32x64xbf16>
    %cst = arith.constant dense<0.000000e+00> : vector<8x64xf32>
    %3 = tpu.matmul %1, %2, %cst {dimension_numbers = #tpu.dot_dimension_numbers<[1], [0], [0], [1], [0, 0, 1, 1], [], []>} : vector<8x32xbf16>, vector<32x64xbf16>, vector<8x64xf32> -> vector<8x64xf32>
    %c0_3 = arith.constant 0 : index
    %c0_4 = arith.constant 0 : index
    %4 = vector.load %arg3[%c0_3, %c0_4] : memref<1x64xf32, #tpu.memory_space<vmem>>, vector<1x64xf32>
    %5 = vector.broadcast %4 : vector<1x64xf32> to vector<8x64xf32>
    %6 = arith.addf %3, %5 : vector<8x64xf32>
    %cst_5 = arith.constant 0.000000e+00 : f32
    %7 = vector.broadcast %cst_5 : f32 to vector<8x64xf32>
    %8 = arith.maximumf %6, %7 : vector<8x64xf32>
    %9 = arith.truncf %8 : vector<8x64xf32> to vector<8x64xbf16>
    %c0_6 = arith.constant 0 : index
    %c0_7 = arith.constant 0 : index
    %10 = vector.load %arg4[%c0_6, %c0_7] : memref<64x64xbf16, #tpu.memory_space<vmem>>, vector<64x64xbf16>
    %cst_8 = arith.constant dense<0.000000e+00> : vector<8x64xf32>
    %11 = tpu.matmul %9, %10, %cst_8 {dimension_numbers = #tpu.dot_dimension_numbers<[1], [0], [0], [1], [0, 0, 1, 1], [], []>} : vector<8x64xbf16>, vector<64x64xbf16>, vector<8x64xf32> -> vector<8x64xf32>
    %c0_9 = arith.constant 0 : index
    %c0_10 = arith.constant 0 : index
    %12 = vector.load %arg5[%c0_9, %c0_10] : memref<1x64xf32, #tpu.memory_space<vmem>>, vector<1x64xf32>
    %13 = vector.broadcast %12 : vector<1x64xf32> to vector<8x64xf32>
    %14 = arith.addf %11, %13 : vector<8x64xf32>
    %cst_11 = arith.constant 0.000000e+00 : f32
    %15 = vector.broadcast %cst_11 : f32 to vector<8x64xf32>
    %16 = arith.maximumf %14, %15 : vector<8x64xf32>
    %17 = arith.truncf %16 : vector<8x64xf32> to vector<8x64xbf16>
    %c0_12 = arith.constant 0 : index
    %c0_13 = arith.constant 0 : index
    %18 = vector.load %arg6[%c0_12, %c0_13] : memref<64x128xbf16, #tpu.memory_space<vmem>>, vector<64x128xbf16>
    %cst_14 = arith.constant dense<0.000000e+00> : vector<8x128xf32>
    %19 = tpu.matmul %17, %18, %cst_14 {dimension_numbers = #tpu.dot_dimension_numbers<[1], [0], [0], [1], [0, 0, 1, 1], [], []>} : vector<8x64xbf16>, vector<64x128xbf16>, vector<8x128xf32> -> vector<8x128xf32>
    %c0_15 = arith.constant 0 : index
    %c0_16 = arith.constant 0 : index
    %20 = vector.load %arg7[%c0_15, %c0_16] : memref<1x128xf32, #tpu.memory_space<vmem>>, vector<1x128xf32>
    %21 = vector.broadcast %20 : vector<1x128xf32> to vector<8x128xf32>
    %22 = arith.addf %19, %21 : vector<8x128xf32>
    %c0_17 = arith.constant 0 : index
    %c0_18 = arith.constant 0 : index
    %23 = vector.load %arg8[%c0_17, %c0_18] : memref<8x128xf32, #tpu.memory_space<vmem>>, vector<8x128xf32>
    tpu.vector_store %arg8[%c0_17, %c0_18], %22 {strides = array<i32>} : memref<8x128xf32, #tpu.memory_space<vmem>>, vector<8x128xf32>,
    return
  }
  func.func @transform_0(%arg0: i32) -> (i32, i32) {
    %c0_i32 = arith.constant 0 : i32
    %c0_i32_0 = arith.constant 0 : i32
    return %arg0, %c0_i32 : i32, i32
  }
  func.func @transform_1(%arg0: i32) -> (i32, i32) {
    %c0_i32 = arith.constant 0 : i32
    %c0_i32_0 = arith.constant 0 : i32
    %c0_i32_1 = arith.constant 0 : i32
    return %c0_i32, %c0_i32_0 : i32, i32
  }
  func.func @transform_2(%arg0: i32) -> (i32, i32) {
    %c0_i32 = arith.constant 0 : i32
    %c0_i32_0 = arith.constant 0 : i32
    %c0_i32_1 = arith.constant 0 : i32
    return %c0_i32, %c0_i32_0 : i32, i32
  }
  func.func @transform_3(%arg0: i32) -> (i32, i32) {
    %c0_i32 = arith.constant 0 : i32
    %c0_i32_0 = arith.constant 0 : i32
    %c0_i32_1 = arith.constant 0 : i32
    return %c0_i32, %c0_i32_0 : i32, i32
  }
  func.func @transform_4(%arg0: i32) -> (i32, i32) {
    %c0_i32 = arith.constant 0 : i32
    %c0_i32_0 = arith.constant 0 : i32
    %c0_i32_1 = arith.constant 0 : i32
    return %c0_i32, %c0_i32_0 : i32, i32
  }
  func.func @transform_5(%arg0: i32) -> (i32, i32) {
    %c0_i32 = arith.constant 0 : i32
    %c0_i32_0 = arith.constant 0 : i32
    %c0_i32_1 = arith.constant 0 : i32
    return %c0_i32, %c0_i32_0 : i32, i32
  }
  func.func @transform_6(%arg0: i32) -> (i32, i32) {
    %c0_i32 = arith.constant 0 : i32
    %c0_i32_0 = arith.constant 0 : i32
    %c0_i32_1 = arith.constant 0 : i32
    return %c0_i32, %c0_i32_0 : i32, i32
  }
  func.func @transform_7(%arg0: i32) -> (i32, i32) {
    %c0_i32 = arith.constant 0 : i32
    %c0_i32_0 = arith.constant 0 : i32
    return %arg0, %c0_i32 : i32, i32
  }
}

</mosaic_0001>

<llo_original>
// kernel: tpu_custom_call.1
$region0: #{tpu_custom_call.1}
  #allocation0 [shape = 'u32[]', space=smem, size = 0x4, offset = 0x4, fixed_abs, tag = 'smem constant byte address 0x4 - core index']
  #allocation1 [shape = 'u32[144,128]{1,0:T(1,128)}', space=vmem, size = 0x12000, scoped, tag = 'internal scratch']
  %s0 = inlined_call_operand.hbm [shape: f32[8,32], index: 0, kind: input, shape index: {}]
  %s1 = inlined_call_operand.hbm [shape: bf16[32,64], index: 1, kind: input, shape index: {}]
  %s2 = inlined_call_operand.vmem [shape: f32[1,64], index: 2, kind: input, shape index: {}]
  %s3 = inlined_call_operand.hbm [shape: bf16[64,64], index: 3, kind: input, shape index: {}]
  %s4 = inlined_call_operand.vmem [shape: f32[1,64], index: 4, kind: input, shape index: {}]
  %s5 = inlined_call_operand.hbm [shape: bf16[64,128], index: 5, kind: input, shape index: {}]
  %s6 = inlined_call_operand.vmem [shape: f32[1,128], index: 6, kind: input, shape index: {}]
  %s7 = inlined_call_operand.hbm [shape: f32[8,128], index: 7, kind: output, shape index: {}]
  %s8 = sld [smem:[#allocation0]]
  $region54: #{tpu_custom_call.1} parent=0
    _
  %s10 = ssub.s32 1, %s8
  %s11 = scalar_select 0, %s10, %s8
  $region1: #{tpu_custom_call.1} parent=0
    #allocation2 [shape = 'u8[4096]{0}', space=vmem, size = 0x1000, scoped, tag = 'input window, operand 0, single buffered']
    #allocation3 [shape = 's32[1]{0}', space=sflag, size = 0x4, scoped, tag = 'scoped memory for tpu_custom_call.1']
    #allocation4 [shape = 's32[1]{0}', space=sflag, size = 0x4, scoped, tag = 'scoped memory for tpu_custom_call.1']
    #allocation5 [shape = 'u8[8192]{0}', space=vmem, size = 0x2000, scoped, tag = 'input window, operand 1, single buffered']
    #allocation6 [shape = 's32[1]{0}', space=sflag, size = 0x4, scoped, tag = 'scoped memory for tpu_custom_call.1']
    #allocation7 [shape = 'u8[16384]{0}', space=vmem, size = 0x4000, scoped, tag = 'input window, operand 3, single buffered']
    #allocation8 [shape = 'u8[16384]{0}', space=vmem, size = 0x4000, scoped, tag = 'input window, operand 5, single buffered']
    #allocation9 [shape = 's32[1]{0}', space=sflag, size = 0x4, scoped, tag = 'scoped memory for tpu_custom_call.1']
    #allocation10 [shape = 'u8[4096]{0}', space=vmem, size = 0x1000, scoped, tag = 'output window, operand 0, single buffered']
    %12 = vsyncpa [#allocation3], 0
    %13 = vsyncpa [#allocation6], 0
    %14 = vsyncpa [#allocation9], 0
    %15 = vsyncpa [#allocation4], 0
    // Predicated region
    $region2: #{tpu_custom_call.1} parent=1 // pred_check
      _
    $region3: #{tpu_custom_call.1} parent=1 // pred_check_branch
      %17 = sbr.rel (0) target = $region5
    $region4: #{tpu_custom_call.1} parent=1 // pred_region
      %s19 = ssub.s32 128, 128
      %20 = vsyncadd [#allocation3], %s19
      %s22 = sshll.u32 [#allocation2], 4
      %s23 = int_to_ptr.vmem [resolvable:$true] %s22
      %25 = dma.hbm_to_vmem [thread:$0]  %s0, 128, %s23, [#allocation3]
    $region5: #{tpu_custom_call.1} parent=1 // pred_fallthru
      _
    // Predicated region
    $region6: #{tpu_custom_call.1} parent=1 // pred_check
      _
    $region7: #{tpu_custom_call.1} parent=1 // pred_check_branch
      %27 = sbr.rel (0) target = $region9
    $region8: #{tpu_custom_call.1} parent=1 // pred_region
      %s29 = ssub.s32 256, 256
      %30 = vsyncadd [#allocation6], %s29
      %s31 = sshll.u32 [#allocation5], 4
      %s32 = int_to_ptr.vmem [resolvable:$true] %s31
      %37 = dma.hbm_to_vmem [thread:$0]  %s1, 256, %s32, [#allocation6], 64, 64, 4
    $region9: #{tpu_custom_call.1} parent=1 // pred_fallthru
      _
    // Predicated region
    $region10: #{tpu_custom_call.1} parent=1 // pred_check
      _
    $region11: #{tpu_custom_call.1} parent=1 // pred_check_branch
      %39 = sbr.rel (0) target = $region13
    $region12: #{tpu_custom_call.1} parent=1 // pred_region
      _
    $region13: #{tpu_custom_call.1} parent=1 // pred_fallthru
      _
    // Predicated region
    $region14: #{tpu_custom_call.1} parent=1 // pred_check
      _
    $region15: #{tpu_custom_call.1} parent=1 // pred_check_branch
      %41 = sbr.rel (0) target = $region17
    $region16: #{tpu_custom_call.1} parent=1 // pred_region
      %s43 = ssub.s32 512, 512
      %44 = vsyncadd [#allocation6], %s43
      %s45 = sshll.u32 [#allocation7], 4
      %s46 = int_to_ptr.vmem [resolvable:$true] %s45
      %51 = dma.hbm_to_vmem [thread:$0]  %s3, 512, %s46, [#allocation6], 64, 64, 4
    $region17: #{tpu_custom_call.1} parent=1 // pred_fallthru
      _
    // Predicated region
    $region18: #{tpu_custom_call.1} parent=1 // pred_check
      _
    $region19: #{tpu_custom_call.1} parent=1 // pred_check_branch
      %53 = sbr.rel (0) target = $region21
    $region20: #{tpu_custom_call.1} parent=1 // pred_region
      _
    $region21: #{tpu_custom_call.1} parent=1 // pred_fallthru
      _
    // Predicated region
    $region22: #{tpu_custom_call.1} parent=1 // pred_check
      _
    $region23: #{tpu_custom_call.1} parent=1 // pred_check_branch
      %55 = sbr.rel (0) target = $region25
    $region24: #{tpu_custom_call.1} parent=1 // pred_region
      %s57 = ssub.s32 512, 512
      %58 = vsyncadd [#allocation9], %s57
      %s59 = sshll.u32 [#allocation8], 4
      %s60 = int_to_ptr.vmem [resolvable:$true] %s59
      %65 = dma.hbm_to_vmem [thread:$0]  %s5, 512, %s60, [#allocation9], 64, 64, 4
    $region25: #{tpu_custom_call.1} parent=1 // pred_fallthru
      _
    // Predicated region
    $region26: #{tpu_custom_call.1} parent=1 // pred_check
      _
    $region27: #{tpu_custom_call.1} parent=1 // pred_check_branch
      %67 = sbr.rel (0) target = $region29
    $region28: #{tpu_custom_call.1} parent=1 // pred_region
      _
    $region29: #{tpu_custom_call.1} parent=1 // pred_fallthru
      _
    // Predicated region
    $region30: #{tpu_custom_call.1} parent=1 // pred_check
      _
    $region31: #{tpu_custom_call.1} parent=1 // pred_check_branch
      %69 = sbr.rel (0) target = $region33
    $region32: #{tpu_custom_call.1} parent=1 // pred_region
      %70 = dma.done [#allocation3], 128
    $region33: #{tpu_custom_call.1} parent=1 // pred_fallthru
      _
    // Predicated region
    $region34: #{tpu_custom_call.1} parent=1 // pred_check
      _
    $region35: #{tpu_custom_call.1} parent=1 // pred_check_branch
      %72 = sbr.rel (0) target = $region37
    $region36: #{tpu_custom_call.1} parent=1 // pred_region
      %73 = dma.done [#allocation6], 256
    $region37: #{tpu_custom_call.1} parent=1 // pred_fallthru
      _
    // Predicated region
    $region38: #{tpu_custom_call.1} parent=1 // pred_check
      _
    $region39: #{tpu_custom_call.1} parent=1 // pred_check_branch
      %75 = sbr.rel (0) target = $region41
    $region40: #{tpu_custom_call.1} parent=1 // pred_region
      %76 = dma.done [#allocation6], 512
    $region41: #{tpu_custom_call.1} parent=1 // pred_fallthru
      _
    // Predicated region
    $region42: #{tpu_custom_call.1} parent=1 // pred_check
      _
    $region43: #{tpu_custom_call.1} parent=1 // pred_check_branch
      %78 = sbr.rel (0) target = $region45
    $region44: #{tpu_custom_call.1} parent=1 // pred_region
      %79 = dma.done [#allocation9], 512
    $region45: #{tpu_custom_call.1} parent=1 // pred_fallthru
      _
    %v81 = vld [vmem:[#allocation2] sm:$0xff]
    %v82 = vpack.c.bf16 %v81, %v81
    %v83 = vld [vmem:[#allocation5] sm:$0xf]
    %v84 = vld [vmem:[#allocation5 + $0x4] sm:$0xf]
    %v85 = vld [vmem:[#allocation5 + $0x8] sm:$0xf]
    %v86 = vld [vmem:[#allocation5 + $0xc] sm:$0xf]
    %v87 = vld [vmem:[%s2] sm:$0x1]
    %v89 = vlaneseq
    %v90 = vshrl.u32 %v89, 7
    %v91 = vsub.s32 0, %v90
    %v92 = vrot.slane %v87, %v91
    %v98 = vunpack.c.l.b16 %v83
    %v99 = vunpack.c.l.b16 %v84
    %v100 = vunpack.c.l.b16 %v85
    %v101 = vunpack.c.l.b16 %v86
    %v102 = vpack.c.b16 %v99, %v98
    %v103 = vpack.c.b16 %v101, %v100
    %vm106 = vcmask 261120
    %v108 = vsel %vm106, %v82, 0
    %110 = vmatprep.subr.bf16.mxu0 0
    %111 = vmatpush1.bf16.msra.mxu0 %v102
    %112 = vmatprep.subr.bf16.mxu0 0
    %113 = vmatpush1.bf16.msra.mxu0 %v103
    %114 = vmatprep.subr.bf16.mxu0 0
    %115 = vmatpush1.bf16.msra.mxu0 0
    %116 = vmatprep.subr.bf16.mxu0 0
    %117 = vmatpush1.bf16.msra.mxu0 0
    %118 = vmatprep.subr.bf16.mxu0 0
    %119 = vmatpush1.bf16.msra.mxu0 0
    %120 = vmatprep.subr.bf16.mxu0 0
    %121 = vmatpush1.bf16.msra.mxu0 0
    %122 = vmatprep.subr.bf16.mxu0 0
    %123 = vmatpush1.bf16.msra.mxu0 0
    %124 = vmatprep.subr.bf16.mxu0 0
    %125 = vmatpush1.bf16.msra.mxu0 0
    %126 = vmatprep.subr.bf16.mxu0 0
    %127 = vmatpush1.bf16.msra.mxu0 0
    %128 = vmatprep.subr.bf16.mxu0 0
    %129 = vmatpush1.bf16.msra.mxu0 0
    %130 = vmatprep.subr.bf16.mxu0 0
    %131 = vmatpush1.bf16.msra.mxu0 0
    %132 = vmatprep.subr.bf16.mxu0 0
    %133 = vmatpush1.bf16.msra.mxu0 0
    %134 = vmatprep.subr.bf16.mxu0 0
    %135 = vmatpush1.bf16.msra.mxu0 0
    %136 = vmatprep.subr.bf16.mxu0 0
    %137 = vmatpush1.bf16.msra.mxu0 0
    %138 = vmatprep.subr.bf16.mxu0 0
    %139 = vmatpush1.bf16.msra.mxu0 0
    %140 = vmatprep.subr.bf16.mxu0 0
    %141 = vmatpush1.bf16.msra.mxu0 0
    %142 = vmatprep.mubr.bf16.mxu0 0
    %143 = vmatmul.mubr.bf16.gmra.mrb[0].mxu0 %v108
    %v144 = vpop.f32.mrb[0].mxu0
    %v145 = vadd.f32 %v92, %v144
    %v146 = vpop.f32.mrb[0].mxu0
    %v147 = vpop.f32.mrb[0].mxu0
    %v148 = vpop.f32.mrb[0].mxu0
    %149 = vdwg.mxu0
    %v150 = vmax.f32 %v145, 0.0
    %v151 = vpack.c.bf16 %v150, %v150
    %v152 = vld [vmem:[#allocation7] sm:$0xf]
    %v153 = vld [vmem:[#allocation7 + $0x4] sm:$0xf]
    %v154 = vld [vmem:[#allocation7 + $0x8] sm:$0xf]
    %v155 = vld [vmem:[#allocation7 + $0xc] sm:$0xf]
    %v156 = vld [vmem:[#allocation7 + $0x10] sm:$0xf]
    %v157 = vld [vmem:[#allocation7 + $0x14] sm:$0xf]
    %v158 = vld [vmem:[#allocation7 + $0x18] sm:$0xf]
    %v159 = vld [vmem:[#allocation7 + $0x1c] sm:$0xf]
    %v160 = vld [vmem:[%s4] sm:$0x1]
    %v162 = vlaneseq
    %v163 = vshrl.u32 %v162, 7
    %v164 = vsub.s32 0, %v163
    %v165 = vrot.slane %v160, %v164
    %v175 = vunpack.c.l.b16 %v152
    %v176 = vunpack.c.l.b16 %v153
    %v177 = vunpack.c.l.b16 %v154
    %v178 = vunpack.c.l.b16 %v155
    %v179 = vunpack.c.l.b16 %v156
    %v180 = vunpack.c.l.b16 %v157
    %v181 = vunpack.c.l.b16 %v158
    %v182 = vunpack.c.l.b16 %v159
    %v183 = vpack.c.b16 %v176, %v175
    %v184 = vpack.c.b16 %v178, %v177
    %v185 = vpack.c.b16 %v180, %v179
    %v186 = vpack.c.b16 %v182, %v181
    %vm191 = vcmask 523264
    %v193 = vsel %vm191, %v151, 0
    %195 = vmatprep.subr.bf16.mxu0 0
    %196 = vmatpush1.bf16.msra.mxu0 %v183
    %197 = vmatprep.subr.bf16.mxu0 0
    %198 = vmatpush1.bf16.msra.mxu0 %v184
    %199 = vmatprep.subr.bf16.mxu0 0
    %200 = vmatpush1.bf16.msra.mxu0 %v185
    %201 = vmatprep.subr.bf16.mxu0 0
    %202 = vmatpush1.bf16.msra.mxu0 %v186
    %203 = vmatprep.subr.bf16.mxu0 0
    %204 = vmatpush1.bf16.msra.mxu0 0
    %205 = vmatprep.subr.bf16.mxu0 0
    %206 = vmatpush1.bf16.msra.mxu0 0
    %207 = vmatprep.subr.bf16.mxu0 0
    %208 = vmatpush1.bf16.msra.mxu0 0
    %209 = vmatprep.subr.bf16.mxu0 0
    %210 = vmatpush1.bf16.msra.mxu0 0
    %211 = vmatprep.subr.bf16.mxu0 0
    %212 = vmatpush1.bf16.msra.mxu0 0
    %213 = vmatprep.subr.bf16.mxu0 0
    %214 = vmatpush1.bf16.msra.mxu0 0
    %215 = vmatprep.subr.bf16.mxu0 0
    %216 = vmatpush1.bf16.msra.mxu0 0
    %217 = vmatprep.subr.bf16.mxu0 0
    %218 = vmatpush1.bf16.msra.mxu0 0
    %219 = vmatprep.subr.bf16.mxu0 0
    %220 = vmatpush1.bf16.msra.mxu0 0
    %221 = vmatprep.subr.bf16.mxu0 0
    %222 = vmatpush1.bf16.msra.mxu0 0
    %223 = vmatprep.subr.bf16.mxu0 0
    %224 = vmatpush1.bf16.msra.mxu0 0
    %225 = vmatprep.subr.bf16.mxu0 0
    %226 = vmatpush1.bf16.msra.mxu0 0
    %227 = vmatprep.mubr.bf16.mxu0 0
    %228 = vmatmul.mubr.bf16.gmra.mrb[0].mxu0 %v193
    %v229 = vpop.f32.mrb[0].mxu0
    %v230 = vadd.f32 %v165, %v229
    %v231 = vpop.f32.mrb[0].mxu0
    %v232 = vpop.f32.mrb[0].mxu0
    %v233 = vpop.f32.mrb[0].mxu0
    %234 = vdwg.mxu0
    %v235 = vmax.f32 %v230, 0.0
    %v236 = vpack.c.bf16 %v235, %v235
    %v237 = vld [vmem:[#allocation8] sm:$0xf]
    %v238 = vld [vmem:[#allocation8 + $0x4] sm:$0xf]
    %v239 = vld [vmem:[#allocation8 + $0x8] sm:$0xf]
    %v240 = vld [vmem:[#allocation8 + $0xc] sm:$0xf]
    %v241 = vld [vmem:[#allocation8 + $0x10] sm:$0xf]
    %v242 = vld [vmem:[#allocation8 + $0x14] sm:$0xf]
    %v243 = vld [vmem:[#allocation8 + $0x18] sm:$0xf]
    %v244 = vld [vmem:[#allocation8 + $0x1c] sm:$0xf]
    %v245 = vld [vmem:[%s6] sm:$0x1]
    %v247 = vlaneseq
    %v248 = vshrl.u32 %v247, 7
    %v249 = vsub.s32 0, %v248
    %v250 = vrot.slane %v245, %v249
    %v260 = vunpack.c.l.b16 %v237
    %v261 = vunpack.c.l.b16 %v238
    %v262 = vunpack.c.l.b16 %v239
    %v263 = vunpack.c.l.b16 %v240
    %v264 = vunpack.c.l.b16 %v241
    %v265 = vunpack.c.l.b16 %v242
    %v266 = vunpack.c.l.b16 %v243
    %v267 = vunpack.c.l.b16 %v244
    %v268 = vpack.c.b16 %v261, %v260
    %v269 = vpack.c.b16 %v263, %v262
    %v270 = vpack.c.b16 %v265, %v264
    %v271 = vpack.c.b16 %v267, %v266
    %v277 = vsel %vm191, %v236, 0
    %279 = vmatprep.subr.bf16.mxu0 0
    %280 = vmatpush1.bf16.msra.mxu0 %v268
    %281 = vmatprep.subr.bf16.mxu0 0
    %282 = vmatpush1.bf16.msra.mxu0 %v269
    %283 = vmatprep.subr.bf16.mxu0 0
    %284 = vmatpush1.bf16.msra.mxu0 %v270
    %285 = vmatprep.subr.bf16.mxu0 0
    %286 = vmatpush1.bf16.msra.mxu0 %v271
    %287 = vmatprep.subr.bf16.mxu0 0
    %288 = vmatpush1.bf16.msra.mxu0 0
    %289 = vmatprep.subr.bf16.mxu0 0
    %290 = vmatpush1.bf16.msra.mxu0 0
    %291 = vmatprep.subr.bf16.mxu0 0
    %292 = vmatpush1.bf16.msra.mxu0 0
    %293 = vmatprep.subr.bf16.mxu0 0
    %294 = vmatpush1.bf16.msra.mxu0 0
    %295 = vmatprep.subr.bf16.mxu0 0
    %296 = vmatpush1.bf16.msra.mxu0 0
    %297 = vmatprep.subr.bf16.mxu0 0
    %298 = vmatpush1.bf16.msra.mxu0 0
    %299 = vmatprep.subr.bf16.mxu0 0
    %300 = vmatpush1.bf16.msra.mxu0 0
    %301 = vmatprep.subr.bf16.mxu0 0
    %302 = vmatpush1.bf16.msra.mxu0 0
    %303 = vmatprep.subr.bf16.mxu0 0
    %304 = vmatpush1.bf16.msra.mxu0 0
    %305 = vmatprep.subr.bf16.mxu0 0
    %306 = vmatpush1.bf16.msra.mxu0 0
    %307 = vmatprep.subr.bf16.mxu0 0
    %308 = vmatpush1.bf16.msra.mxu0 0
    %309 = vmatprep.subr.bf16.mxu0 0
    %310 = vmatpush1.bf16.msra.mxu0 0
    %311 = vmatprep.mubr.bf16.mxu0 0
    %312 = vmatmul.mubr.bf16.gmra.mrb[0].mxu0 %v277
    %v313 = vpop.f32.mrb[0].mxu0
    %v314 = vadd.f32 %v250, %v313
    %v315 = vpop.f32.mrb[0].mxu0
    %v316 = vpop.f32.mrb[0].mxu0
    %v317 = vpop.f32.mrb[0].mxu0
    %318 = vdwg.mxu0
    %319 = vst [vmem:[#allocation10] sm:$0xff] %v314
    // Predicated region
    $region46: #{tpu_custom_call.1} parent=1 // pred_check
      _
    $region47: #{tpu_custom_call.1} parent=1 // pred_check_branch
      %321 = sbr.rel (0) target = $region49
    $region48: #{tpu_custom_call.1} parent=1 // pred_region
      %s323 = ssub.s32 128, 128
      %324 = vsyncadd [#allocation4], %s323
      %s326 = sshll.u32 [#allocation10], 4
      %s327 = int_to_ptr.vmem [resolvable:$true] %s326
      %329 = dma.vmem_to_hbm [thread:$0]  %s327, 128, %s7, [#allocation4]
    $region49: #{tpu_custom_call.1} parent=1 // pred_fallthru
      _
    // Predicated region
    $region50: #{tpu_custom_call.1} parent=1 // pred_check
      _
    $region51: #{tpu_custom_call.1} parent=1 // pred_check_branch
      %331 = sbr.rel (0) target = $region53
    $region52: #{tpu_custom_call.1} parent=1 // pred_region
      %332 = dma.done [#allocation4], 128
    $region53: #{tpu_custom_call.1} parent=1 // pred_fallthru
      _
    %333 = vsyncpa [#allocation3], 1
    %334 = vsyncpa [#allocation6], 1
    %335 = vsyncpa [#allocation9], 1
    %336 = vsyncpa [#allocation4], 1

</llo_original>
